<compile_context>
chip_gen: v5e
topology: v5e:2x2
jax: 0.10.0
libtpu: 0.0.40
codegen_flags: <defaults>
</compile_context>

<pallas_src>
import jax
import jax.numpy as jnp
from jax.experimental import pallas as pl
from jax.experimental.pallas import tpu as pltpu


def _gather_copy_kernel(idx_ref, x_ref, o_ref):
    # idx_ref (SMEM scalar-prefetch) is consumed only by the BlockSpec
    # index_maps; the body is a single sublane/lane-dense VMEM copy of one
    # (batch x rows_tile x lanes) slab of the gathered channel.
    del idx_ref
    o_ref[...] = x_ref[...]


# Per-block VMEM budget (bytes). 4 buffers live at once (input + output,
# each double-buffered) -> ~16 MiB peak, under the default scoped VMEM limit
# on every generation (v5e 16 MiB, v6e/v7x 32 MiB) and far under v7x's 64 MiB.
_BLOCK_BYTES_BUDGET = 4 * 1024 * 1024


def _choose_row_tile(rows, bytes_per_row):
    """Largest row tile that divides `rows`, is sublane-aligned (multiple of 8
    or the full extent), and fits the per-block VMEM budget."""
    if rows * bytes_per_row <= _BLOCK_BYTES_BUDGET:
        return rows
    best = None
    t = 8
    while t < rows:
        if rows % t == 0 and t * bytes_per_row <= _BLOCK_BYTES_BUDGET:
            best = t
        t += 8
    # No legal smaller tile (rows not a multiple of 8): fall back to the full
    # extent (still correct; compiler may need a larger scoped limit).
    return best if best is not None else rows


@jax.jit
def permute_channels_pallas(x_nchw, indices):
    """out[:, c, :, :] = x[:, indices[c], :, :] for an NCHW tensor."""
    b, c, h, w = x_nchw.shape
    hw = h * w
    itemsize = jnp.dtype(x_nchw.dtype).itemsize
    idx = indices.astype(jnp.int32)

    # Lane-dense layout: put 128 elements on the lane axis when the plane size
    # allows it (free, contiguous reshape); otherwise keep (h, w) as full-dim
    # blocks (legal; stores may be masked but still correct).
    if hw % 128 == 0:
        rows, lanes = hw // 128, 128
    else:
        rows, lanes = h, w
    x4 = x_nchw.reshape(b, c, rows, lanes)

    # One grid step moves the full-batch slab of one gathered channel; tile
    # the sublane axis only if that slab exceeds the per-block VMEM budget.
    tr = _choose_row_tile(rows, b * lanes * itemsize)
    n_row_tiles = rows // tr
    block = (b, 1, tr, lanes)

    if n_row_tiles == 1:
        grid = (c,)
        in_map = lambda ci, idx_ref: (0, idx_ref[ci], 0, 0)
        out_map = lambda ci, idx_ref: (0, ci, 0, 0)
        sem = ("parallel",)
    else:
        grid = (c, n_row_tiles)
        in_map = lambda ci, ri, idx_ref: (0, idx_ref[ci], ri, 0)
        out_map = lambda ci, ri, idx_ref: (0, ci, ri, 0)
        sem = ("parallel", "parallel")

    out = pl.pallas_call(
        _gather_copy_kernel,
        out_shape=jax.ShapeDtypeStruct((b, c, rows, lanes), x_nchw.dtype),
        grid_spec=pltpu.PrefetchScalarGridSpec(
            num_scalar_prefetch=1,
            grid=grid,
            in_specs=[pl.BlockSpec(block, in_map)],
            out_specs=pl.BlockSpec(block, out_map),
        ),
        compiler_params=pltpu.CompilerParams(dimension_semantics=sem),
    )(idx, x4)
    return out.reshape(b, c, h, w)


class Permute2dPallas:
    """JAX/Pallas port of Permute2d(num_channels, shuffle)."""

    def __init__(self, num_channels, shuffle, key=None):
        self.num_channels = num_channels
        indices = jnp.arange(num_channels - 1, -1, -1, dtype=jnp.int32)
        if shuffle:
            if key is None:
                key = jax.random.PRNGKey(0)
            indices = jax.random.permutation(key, indices)
        self.indices = indices
        # Inverse permutation: indices_inverse[indices[i]] = i
        self.indices_inverse = jnp.argsort(indices).astype(jnp.int32)

    def __call__(self, x, reverse=False):
        assert x.ndim == 4
        idx = self.indices_inverse if reverse else self.indices
        return permute_channels_pallas(x, idx)


if __name__ == "__main__":
    key = jax.random.PRNGKey(0)
    key, k_x, k_perm = jax.random.split(key, 3)

    batch, channels, spatial = 2, 4, 16
    x = jax.random.normal(k_x, (batch, channels, spatial, spatial), jnp.float32)

    # shuffle=False: deterministic channel reversal (module default path).
    perm = Permute2dPallas(channels, shuffle=False)
    y = jax.block_until_ready(perm(x))
    assert y.shape == x.shape, y.shape
    ref = jnp.take(x, perm.indices, axis=1)
    assert jnp.array_equal(y, ref)
    # reverse=True must exactly invert the permutation.
    x_back = jax.block_until_ready(perm(y, reverse=True))
    assert jnp.array_equal(x_back, x)

    # shuffle=True: fixed random permutation (deterministic via PRNGKey).
    perm_s = Permute2dPallas(channels, shuffle=True, key=k_perm)
    y_s = jax.block_until_ready(perm_s(x))
    ref_s = jnp.take(x, perm_s.indices, axis=1)
    assert jnp.array_equal(y_s, ref_s)
    x_back_s = jax.block_until_ready(perm_s(y_s, reverse=True))
    assert jnp.array_equal(x_back_s, x)

    # Non-128-multiple plane (masked-store fallback path) still correct.
    x_odd = jax.random.normal(key, (batch, channels, 5, 7), jnp.float32)
    y_odd = jax.block_until_ready(perm(x_odd))
    assert jnp.array_equal(y_odd, jnp.take(x_odd, perm.indices, axis=1))

    print("KERNEL_OK")
</pallas_src>

<mosaic_0001>
module attributes {stable_mosaic.version = 11 : i64} {
  func.func @_gather_copy_kernel(%arg0: i32, %arg1: memref<4xi32, #tpu.memory_space<smem>>, %arg2: memref<2x1x2x128xf32, #tpu.memory_space<vmem>>, %arg3: memref<2x1x2x128xf32, #tpu.memory_space<vmem>>) attributes {dimension_semantics = [#tpu.dimension_semantics<parallel>], iteration_bounds = array<i64: 4>, scalar_prefetch = 1 : i64, scratch_operands = 0 : i64, tpu.core_type = #tpu.core_type<tc>, window_params = [{transform_indices = @transform_0, window_bounds = array<i64: 2, 1, 2, 128>}, {transform_indices = @transform_1, window_bounds = array<i64: 2, 1, 2, 128>}]} {
    %c0 = arith.constant 0 : index
    %c0_0 = arith.constant 0 : index
    %c0_1 = arith.constant 0 : index
    %c0_2 = arith.constant 0 : index
    %0 = vector.load %arg2[%c0, %c0_0, %c0_1, %c0_2] : memref<2x1x2x128xf32, #tpu.memory_space<vmem>>, vector<2x1x2x128xf32>
    %c0_3 = arith.constant 0 : index
    %c0_4 = arith.constant 0 : index
    %c0_5 = arith.constant 0 : index
    %c0_6 = arith.constant 0 : index
    %1 = vector.load %arg3[%c0_3, %c0_4, %c0_5, %c0_6] : memref<2x1x2x128xf32, #tpu.memory_space<vmem>>, vector<2x1x2x128xf32>
    tpu.vector_store %arg3[%c0_3, %c0_4, %c0_5, %c0_6], %0 {strides = array<i32>} : memref<2x1x2x128xf32, #tpu.memory_space<vmem>>, vector<2x1x2x128xf32>,
    return
  }
  func.func @transform_0(%arg0: i32, %arg1: memref<4xi32, #tpu.memory_space<smem>>) -> (i32, i32, i32, i32) {
    %0 = arith.index_cast %arg0 : i32 to index
    %1 = memref.load %arg1[%0] : memref<4xi32, #tpu.memory_space<smem>>
    %c0_i32 = arith.constant 0 : i32
    %c0_i32_0 = arith.constant 0 : i32
    %c0_i32_1 = arith.constant 0 : i32
    %c0_i32_2 = arith.constant 0 : i32
    return %c0_i32, %1, %c0_i32_0, %c0_i32_1 : i32, i32, i32, i32
  }
  func.func @transform_1(%arg0: i32, %arg1: memref<4xi32, #tpu.memory_space<smem>>) -> (i32, i32, i32, i32) {
    %c0_i32 = arith.constant 0 : i32
    %c0_i32_0 = arith.constant 0 : i32
    %c0_i32_1 = arith.constant 0 : i32
    %c0_i32_2 = arith.constant 0 : i32
    return %c0_i32, %arg0, %c0_i32_0, %c0_i32_1 : i32, i32, i32, i32
  }
}

</mosaic_0001>

<llo_original>
// kernel: permute_channels_pallas.1
$region0: #{permute_channels_pallas.1}
  #allocation0 [shape = 'u32[]', space=smem, size = 0x4, offset = 0x4, fixed_abs, tag = 'smem constant byte address 0x4 - core index']
  #allocation1 [shape = 'u32[72,128]{1,0:T(1,128)}', space=vmem, size = 0x9000, scoped, tag = 'internal scratch']
  #allocation2 [shape = 's32[1]{0}', space=sflag, size = 0x4, scoped, tag = 'scoped memory for permute_channels_pallas.1']
  #allocation3 [shape = 'u8[512]{0}', space=smem, size = 0x200, scoped, tag = 'prefetched SMEM operand 0']
  %s0 = inlined_call_operand.vmem [shape: s32[4], index: 0, kind: input, shape index: {}]
  %s1 = inlined_call_operand.vmem [shape: f32[2,4,2,128], index: 1, kind: input, shape index: {}]
  %s2 = inlined_call_operand.vmem [shape: f32[2,4,2,128], index: 2, kind: output, shape index: {}]
  %s3 = sld [smem:[#allocation0]]
  $region101: #{permute_channels_pallas.1} parent=0
    _
  %s5 = ssub.s32 1, %s3
  %s6 = scalar_select 0, %s5, %s3
  %s8 = sshll.u32 %s0, 4
  %s9 = int_to_ptr.vmem [resolvable:$true] %s8
  %11 = dma.vmem_to_smem %s9, 16, [#allocation3], [#allocation2]
  %13 = dma.done [#allocation2], 16
  %14 = sfence
  $region1: #{permute_channels_pallas.1} parent=0
    #allocation4 [shape = 'u8[4096]{0}', space=vmem, size = 0x1000, scoped, tag = 'input window, operand 1']
    #allocation5 [shape = 'u8[4096]{0}', space=vmem, size = 0x1000, scoped, tag = 'output window, operand 0']
    loop: start=0, step=1, limit=6
    $region2: #{permute_channels_pallas.1} parent=1 // loop_pre_header
      _
    $region3: #{permute_channels_pallas.1} parent=1 // loop_header
      %s16 = sphi 0, %s20
      %p17 = scmp.ge.s32.totalorder %s16, 6
      %s28 = sphi 0, %s30
      %s31 = sphi 0, %s28
      %s32 = sphi 0, %s31
      %s48 = sphi 0, %s32
      %s54 = sphi 0, %s56
      %s57 = sphi 0, %s54
      %s58 = sphi 0, %s57
      %s74 = sphi 0, %s58
    $region4: #{permute_channels_pallas.1} parent=1 // loop_header_branch
      %19 = sbr.rel (%p17) target = $region8
    $region5: #{permute_channels_pallas.1} parent=1 // loop_body
      %s21 = ssub.s32 %s16, 1
      %s22 = ssub.s32 %s16, 2
      %s23 = sadd.s32 %s16, 1
      %s24 = sld [smem:[#allocation3 + %s16]]
      %s25 = sld [smem:[#allocation3 + %s23]]
      %s26 = ssub.s32 %s24, %s25
      %p27 = scmp.eq.s32.totalorder %s26, 0
      %s29 = sadd.s32 %s28, 1
      %s30 = scalar_select %p27, %s28, %s29
      %p33 = pneg %p27
      %p34 = scmp.eq.s32.totalorder %s16, 3
      %p35 = por %p33, %p34
      %p36 = scmp.ne.s32.totalorder %s28, %s31
      %p37 = scmp.eq.s32.totalorder %s16, 0
      %p38 = por %p36, %p37
      %p39 = scmp.ne.s32.totalorder %s28, %s31
      %p40 = scmp.eq.s32.totalorder %s21, 3
      %p41 = por %p39, %p40
      %p42 = scmp.ne.s32.totalorder %s31, %s32
      %p43 = scmp.eq.s32.totalorder %s21, 0
      %p44 = por %p42, %p43
      %p45 = scmp.ne.s32.totalorder %s31, %s32
      %p46 = scmp.eq.s32.totalorder %s22, 3
      %p47 = por %p45, %p46
      %p49 = scmp.ne.s32.totalorder %s32, %s48
      %p50 = scmp.eq.s32.totalorder %s22, 0
      %p51 = por %p49, %p50
      %s52 = ssub.s32 %s16, %s23
      %p53 = scmp.eq.s32.totalorder %s52, 0
      %s55 = sadd.s32 %s54, 1
      %s56 = scalar_select %p53, %s54, %s55
      %p59 = pneg %p53
      %p60 = scmp.eq.s32.totalorder %s16, 3
      %p61 = por %p59, %p60
      %p62 = scmp.ne.s32.totalorder %s54, %s57
      %p63 = scmp.eq.s32.totalorder %s16, 0
      %p64 = por %p62, %p63
      %p65 = scmp.ne.s32.totalorder %s54, %s57
      %p66 = scmp.eq.s32.totalorder %s21, 3
      %p67 = por %p65, %p66
      %p68 = scmp.ne.s32.totalorder %s57, %s58
      %p69 = scmp.eq.s32.totalorder %s21, 0
      %p70 = por %p68, %p69
      %p71 = scmp.ne.s32.totalorder %s57, %s58
      %p72 = scmp.eq.s32.totalorder %s22, 3
      %p73 = por %p71, %p72
      %p75 = scmp.ne.s32.totalorder %s58, %s74
      %p76 = scmp.eq.s32.totalorder %s22, 0
      %p77 = por %p75, %p76
      %p78 = scmp.le.s32.totalorder 1, %s16
      %p79 = scmp.lt.s32.totalorder %s16, 5
      %p80 = pnand %p78, %p79
      %p81 = pneg %p80
      // Predicated region
      $region9: #{permute_channels_pallas.1} parent=5 // pred_check
        _
      $region10: #{permute_channels_pallas.1} parent=5 // pred_check_branch
        %83 = sbr.rel (%p80) target = $region12
      $region11: #{permute_channels_pallas.1} parent=5 // pred_region
        %s84 = ssub.s32 %s16, 1
      $region12: #{permute_channels_pallas.1} parent=5 // pred_fallthru
        _
      %p85 = scmp.lt.s32.totalorder %s16, 4
      // Predicated region
      $region13: #{permute_channels_pallas.1} parent=5 // pred_check
        %p86 = pneg %p85
      $region14: #{permute_channels_pallas.1} parent=5 // pred_check_branch
        %88 = sbr.rel (%p86) target = $region16
      $region15: #{permute_channels_pallas.1} parent=5 // pred_region
        // Predicated region
        $region17: #{permute_channels_pallas.1} parent=15 // pred_check
          %p89 = pneg %p38
        $region18: #{permute_channels_pallas.1} parent=15 // pred_check_branch
          %91 = sbr.rel (%p89) target = $region20
        $region19: #{permute_channels_pallas.1} parent=15 // pred_region
          %s92 = sand.u32 %s28, 1
          %s93 = sand.u32 %s28, 1
          %s94 = smul.addr %s93, 4
          %s95 = scalar_lea.vmem [#allocation4], %s94
          %s96 = sld [smem:[#allocation3 + %s16]]
          %s97 = smul.addr %s96, 2
          %s98 = scalar_lea.vmem %s1, %s97
          // Predicated region
          $region21: #{permute_channels_pallas.1} parent=19 // pred_check
            _
          $region22: #{permute_channels_pallas.1} parent=19 // pred_check_branch
            %100 = sbr.rel (0) target = $region24
          $region23: #{permute_channels_pallas.1} parent=19 // pred_region
            // Predicated region
            $region25: #{permute_channels_pallas.1} parent=23 // pred_check
              _
            $region26: #{permute_channels_pallas.1} parent=23 // pred_check_branch
              %102 = sbr.rel target = $region28
            $region27: #{permute_channels_pallas.1} parent=23 // pred_region
              // Predicated region
              $region40: #{permute_channels_pallas.1} parent=27 // pred_check
                _
              $region41: #{permute_channels_pallas.1} parent=27 // pred_check_branch
                %120 = sbr.rel (0) target = $region43
              $region42: #{permute_channels_pallas.1} parent=27 // pred_region
                %s122 = ssub.s32 4, 1
                loop: start=0, step=1, limit=1
                $region44: #{permute_channels_pallas.1} parent=42 // loop_pre_header
                  _
                $region45: #{permute_channels_pallas.1} parent=42 // loop_header
                  %s124 = sphi 0, %s128
                  %p125 = scmp.ge.s32.totalorder %s124, 1
                  %s129 = sphi %s98, %s98
                  %s130 = sphi %s95, %s95
                $region46: #{permute_channels_pallas.1} parent=42 // loop_header_branch
                  %127 = sbr.rel (%p125) target = $region50
                $region47: #{permute_channels_pallas.1} parent=42 // loop_body
                  %v131 = vld [vmem:[%s129] sm:%s122]
                  %132 = vst [vmem:[%s130] sm:%s122] %v131
                  %v133 = vld [vmem:[%s129 + $0x8] sm:%s122]
                  %134 = vst [vmem:[%s130 + $0x2] sm:%s122] %v133
                $region48: #{permute_channels_pallas.1} parent=42 // loop_footer
                  %s128 = sadd.s32 1, %s124
                $region49: #{permute_channels_pallas.1} parent=42 // loop_footer_branch
                  %123 = sbr.rel target = $region45
                $region50: #{permute_channels_pallas.1} parent=42 // loop_exit
                  _
              $region43: #{permute_channels_pallas.1} parent=27 // pred_fallthru
                _
            $region28: #{permute_channels_pallas.1} parent=23 // pred_fallthru
              _
            // Predicated region
            $region29: #{permute_channels_pallas.1} parent=23 // pred_check
              _
            $region30: #{permute_channels_pallas.1} parent=23 // pred_check_branch
              %104 = sbr.rel (0) target = $region32
            $region31: #{permute_channels_pallas.1} parent=23 // pred_region
              %s106 = ssub.s32 4, 1
              loop: start=0, step=1, limit=1
              $region33: #{permute_channels_pallas.1} parent=31 // loop_pre_header
                _
              $region34: #{permute_channels_pallas.1} parent=31 // loop_header
                %s108 = sphi 0, %s112
                %p109 = scmp.ge.s32.totalorder %s108, 1
                %s113 = sphi %s98, %s98
                %s114 = sphi %s95, %s95
              $region35: #{permute_channels_pallas.1} parent=31 // loop_header_branch
                %111 = sbr.rel (%p109) target = $region39
              $region36: #{permute_channels_pallas.1} parent=31 // loop_body
                %v115 = vld [vmem:[%s113] sm:%s106]
                %116 = vst [vmem:[%s114] sm:%s106] %v115
                %v117 = vld [vmem:[%s113 + $0x8] sm:%s106]
                %118 = vst [vmem:[%s114 + $0x2] sm:%s106] %v117
              $region37: #{permute_channels_pallas.1} parent=31 // loop_footer
                %s112 = sadd.s32 1, %s108
              $region38: #{permute_channels_pallas.1} parent=31 // loop_footer_branch
                %107 = sbr.rel target = $region34
              $region39: #{permute_channels_pallas.1} parent=31 // loop_exit
                _
            $region32: #{permute_channels_pallas.1} parent=23 // pred_fallthru
              _
          $region24: #{permute_channels_pallas.1} parent=19 // pred_fallthru
            _
          %135 = vnop
        $region20: #{permute_channels_pallas.1} parent=15 // pred_fallthru
          _
      $region16: #{permute_channels_pallas.1} parent=5 // pred_fallthru
        _
      %p136 = scmp.le.s32.totalorder 1, %s16
      %p137 = scmp.lt.s32.totalorder %s16, 5
      %p138 = pnand %p136, %p137
      %p139 = pneg %p138
      // Predicated region
      $region51: #{permute_channels_pallas.1} parent=5 // pred_check
        _
      $region52: #{permute_channels_pallas.1} parent=5 // pred_check_branch
        %141 = sbr.rel (%p138) target = $region54
      $region53: #{permute_channels_pallas.1} parent=5 // pred_region
        %s142 = ssub.s32 %s16, 1
        %s143 = sand.u32 %s31, 1
        %s144 = sand.u32 %s31, 1
        %s145 = smul.addr %s144, 4
        %s146 = scalar_lea.vmem [#allocation4], %s145
        // Predicated region
        $region55: #{permute_channels_pallas.1} parent=53 // pred_check
          %p147 = pneg %p44
        $region56: #{permute_channels_pallas.1} parent=53 // pred_check_branch
          %149 = sbr.rel (%p147) target = $region58
        $region57: #{permute_channels_pallas.1} parent=53 // pred_region
          _
        $region58: #{permute_channels_pallas.1} parent=53 // pred_fallthru
          _
        %s150 = sand.u32 %s31, 1
        %s151 = sand.u32 %s31, 1
        %s152 = smul.addr %s151, 4
        %s153 = scalar_lea.vmem [#allocation4], %s152
        %p154 = pneg %p44
        %p155 = pneg %p41
        %p156 = pneg %p70
        %p157 = pneg %p67
        %s158 = sand.u32 %s57, 1
        %s159 = sand.u32 %s57, 1
        %s160 = smul.addr %s159, 4
        %s161 = scalar_lea.vmem [#allocation5], %s160
        %s162 = sld [smem:[#allocation3 + %s21]]
        %v163 = vld [vmem:[%s146] sm:$0x3]
        %v164 = vld [vmem:[%s146 + $0x2] sm:$0x3]
        %165 = vst [vmem:[%s161] sm:$0x3] %v163
        %166 = vst [vmem:[%s161 + $0x2] sm:$0x3] %v164
        %s167 = sand.u32 %s57, 1
        %s168 = sand.u32 %s57, 1
        %s169 = smul.addr %s168, 4
        %s170 = scalar_lea.vmem [#allocation5], %s169
        // Predicated region
        $region59: #{permute_channels_pallas.1} parent=53 // pred_check
          %p171 = pneg %p67
        $region60: #{permute_channels_pallas.1} parent=53 // pred_check_branch
          %173 = sbr.rel (%p171) target = $region62
        $region61: #{permute_channels_pallas.1} parent=53 // pred_region
          %s174 = smul.addr %s21, 2
          %s175 = scalar_lea.vmem %s2, %s174
          // Predicated region
          $region63: #{permute_channels_pallas.1} parent=61 // pred_check
            _
          $region64: #{permute_channels_pallas.1} parent=61 // pred_check_branch
            %177 = sbr.rel (0) target = $region66
          $region65: #{permute_channels_pallas.1} parent=61 // pred_region
            // Predicated region
            $region67: #{permute_channels_pallas.1} parent=65 // pred_check
              _
            $region68: #{permute_channels_pallas.1} parent=65 // pred_check_branch
              %179 = sbr.rel target = $region70
            $region69: #{permute_channels_pallas.1} parent=65 // pred_region
              // Predicated region
              $region82: #{permute_channels_pallas.1} parent=69 // pred_check
                _
              $region83: #{permute_channels_pallas.1} parent=69 // pred_check_branch
                %197 = sbr.rel (0) target = $region85
              $region84: #{permute_channels_pallas.1} parent=69 // pred_region
                %s199 = ssub.s32 4, 1
                loop: start=0, step=1, limit=1
                $region86: #{permute_channels_pallas.1} parent=84 // loop_pre_header
                  _
                $region87: #{permute_channels_pallas.1} parent=84 // loop_header
                  %s201 = sphi 0, %s205
                  %p202 = scmp.ge.s32.totalorder %s201, 1
                  %s206 = sphi %s170, %s170
                  %s207 = sphi %s175, %s175
                $region88: #{permute_channels_pallas.1} parent=84 // loop_header_branch
                  %204 = sbr.rel (%p202) target = $region92
                $region89: #{permute_channels_pallas.1} parent=84 // loop_body
                  %v208 = vld [vmem:[%s206] sm:%s199]
                  %209 = vst [vmem:[%s207] sm:%s199] %v208
                  %v210 = vld [vmem:[%s206 + $0x2] sm:%s199]
                  %211 = vst [vmem:[%s207 + $0x8] sm:%s199] %v210
                $region90: #{permute_channels_pallas.1} parent=84 // loop_footer
                  %s205 = sadd.s32 1, %s201
                $region91: #{permute_channels_pallas.1} parent=84 // loop_footer_branch
                  %200 = sbr.rel target = $region87
                $region92: #{permute_channels_pallas.1} parent=84 // loop_exit
                  _
              $region85: #{permute_channels_pallas.1} parent=69 // pred_fallthru
                _
            $region70: #{permute_channels_pallas.1} parent=65 // pred_fallthru
              _
            // Predicated region
            $region71: #{permute_channels_pallas.1} parent=65 // pred_check
              _
            $region72: #{permute_channels_pallas.1} parent=65 // pred_check_branch
              %181 = sbr.rel (0) target = $region74
            $region73: #{permute_channels_pallas.1} parent=65 // pred_region
              %s183 = ssub.s32 4, 1
              loop: start=0, step=1, limit=1
              $region75: #{permute_channels_pallas.1} parent=73 // loop_pre_header
                _
              $region76: #{permute_channels_pallas.1} parent=73 // loop_header
                %s185 = sphi 0, %s189
                %p186 = scmp.ge.s32.totalorder %s185, 1
                %s190 = sphi %s170, %s170
                %s191 = sphi %s175, %s175
              $region77: #{permute_channels_pallas.1} parent=73 // loop_header_branch
                %188 = sbr.rel (%p186) target = $region81
              $region78: #{permute_channels_pallas.1} parent=73 // loop_body
                %v192 = vld [vmem:[%s190] sm:%s183]
                %193 = vst [vmem:[%s191] sm:%s183] %v192
                %v194 = vld [vmem:[%s190 + $0x2] sm:%s183]
                %195 = vst [vmem:[%s191 + $0x8] sm:%s183] %v194
              $region79: #{permute_channels_pallas.1} parent=73 // loop_footer
                %s189 = sadd.s32 1, %s185
              $region80: #{permute_channels_pallas.1} parent=73 // loop_footer_branch
                %184 = sbr.rel target = $region76
              $region81: #{permute_channels_pallas.1} parent=73 // loop_exit
                _
            $region74: #{permute_channels_pallas.1} parent=65 // pred_fallthru
              _
          $region66: #{permute_channels_pallas.1} parent=61 // pred_fallthru
            _
          %212 = vnop
        $region62: #{permute_channels_pallas.1} parent=53 // pred_fallthru
          _
      $region54: #{permute_channels_pallas.1} parent=5 // pred_fallthru
        _
      %p213 = scmp.le.s32.totalorder 2, %s16
      // Predicated region
      $region93: #{permute_channels_pallas.1} parent=5 // pred_check
        %p214 = pneg %p213
      $region94: #{permute_channels_pallas.1} parent=5 // pred_check_branch
        %216 = sbr.rel (%p214) target = $region96
      $region95: #{permute_channels_pallas.1} parent=5 // pred_region
        %s217 = ssub.s32 %s16, 2
        // Predicated region
        $region97: #{permute_channels_pallas.1} parent=95 // pred_check
          %p218 = pneg %p73
        $region98: #{permute_channels_pallas.1} parent=95 // pred_check_branch
          %220 = sbr.rel (%p218) target = $region100
        $region99: #{permute_channels_pallas.1} parent=95 // pred_region
          %s221 = sand.u32 %s58, 1
          %s222 = sand.u32 %s58, 1
          %s223 = smul.addr %s222, 4
          %s224 = scalar_lea.vmem [#allocation5], %s223
        $region100: #{permute_channels_pallas.1} parent=95 // pred_fallthru
          _
      $region96: #{permute_channels_pallas.1} parent=5 // pred_fallthru
        _
    $region6: #{permute_channels_pallas.1} parent=1 // loop_footer
      %s20 = sadd.s32 1, %s16
    $region7: #{permute_channels_pallas.1} parent=1 // loop_footer_branch
      %15 = sbr.rel target = $region3
    $region8: #{permute_channels_pallas.1} parent=1 // loop_exit
      _

</llo_original>
